<compile_context>
chip_gen: v7x
topology: tpu7x:2x2x1
jax: 0.10.0
libtpu: 0.0.40
codegen_flags: <defaults>
</compile_context>

<pallas_src>
import jax
import jax.numpy as jnp
from jax.experimental import pallas as pl
from jax.experimental.pallas import tpu as pltpu


# ----------------------------- Pallas kernel ------------------------------ #
def combined_kernel(x_ref, w1_ref, b1_ref, w2_ref, b2_ref,
                    wcb_ref, w3_ref, b3_ref, out_ref):
    # ---- autoencoder.encode: Linear+ReLU, Linear+ReLU (bf16 in, f32 acc) ----
    h = jnp.dot(x_ref[...], w1_ref[...], preferred_element_type=jnp.float32)
    h = jnp.maximum(h + b1_ref[...], 0.0)                        # (Bp, HIDDEN) f32
    z = jnp.dot(h.astype(jnp.bfloat16), w2_ref[...],
                preferred_element_type=jnp.float32)
    z = jnp.maximum(z + b2_ref[...], 0.0)                        # (Bp, L) latent f32

    L = z.shape[-1]
    conv_ch = wcb_ref.shape[0]

    # ---- carnet: unsqueeze(1) + Conv1d(1->CC, k=3, pad=1) + ReLU ----
    # The 3-tap conv is expressed with shifted copies of z (zero-padded ends)
    # plus per-channel scalar FMAs; shifts go to the XLU, FMAs to the VPU.
    lane = jax.lax.broadcasted_iota(jnp.int32, z.shape, 1)
    z_m1 = jnp.where(lane == 0, 0.0,
                     pltpu.roll(z, shift=1, axis=1))             # z[i-1]
    z_p1 = jnp.where(lane == L - 1, 0.0,
                     pltpu.roll(z, shift=L - 1, axis=1))         # z[i+1]

    # Per-channel maps, ReLU'd, cast to bf16 and concatenated along the lane
    # axis into the channel-major flatten (Bp, CC*L); one MXU dot vs. w3.
    maps = []
    for oc in range(conv_ch):
        # wcb_ref row: [tap(-1), tap(0), tap(+1), bias]  (kernel_size == 3)
        m = (z_m1 * wcb_ref[oc, 0] + z * wcb_ref[oc, 1]
             + z_p1 * wcb_ref[oc, 2] + wcb_ref[oc, 3])
        maps.append(jnp.maximum(m, 0.0).astype(jnp.bfloat16))
    flat = jnp.concatenate(maps, axis=-1)                        # (Bp, CC*L) bf16

    y = jnp.dot(flat, w3_ref[...], preferred_element_type=jnp.float32)
    out_ref[...] = y + b3_ref[...]                               # dense (Bp, Cpad) f32


# ------------------------------- wrapper ----------------------------------- #
_BF16_SUBLANES = 16   # bf16 sublane packing (16, 128)
_LANES = 128          # lane width


def _round_up(n, m):
    return ((n + m - 1) // m) * m


def prepare_params(params, num_classes):
    """One-time weight preprocessing (hoisted out of the per-call hot path)."""
    w1, b1, w2, b2, wc, bc, w3, b3 = params
    c_pad = _round_up(max(num_classes, _LANES), _LANES)

    w1_bf16 = w1.astype(jnp.bfloat16)
    w2_bf16 = w2.astype(jnp.bfloat16)
    # Conv taps + bias fused into one tiny SMEM operand: (CC, K + 1).
    wcb = jnp.concatenate([wc[:, 0, :], bc[:, None]], axis=1)
    w3_pad = jnp.pad(w3, ((0, 0), (0, c_pad - num_classes))).astype(jnp.bfloat16)
    b3_pad = jnp.pad(b3, ((0, 0), (0, c_pad - num_classes)))
    prepped = (w1_bf16, b1, w2_bf16, b2, wcb, w3_pad, b3_pad)
    return jax.tree_util.tree_map(jax.block_until_ready, prepped)


def combined_forward(x_nchw, prepped, num_classes):
    """CombinedModel.forward via one fused Pallas kernel (3 matmuls + conv)."""
    w1_bf16, b1, w2_bf16, b2, wcb, w3_pad, b3_pad = prepped
    B = x_nchw.shape[0]
    c_pad = w3_pad.shape[1]

    # torch `.view(B, -1)` row-major flatten of the NCHW input.
    x_flat = x_nchw.reshape(B, -1).astype(jnp.float32)

    # Pad batch to the bf16 sublane-pack multiple (16) so the bf16 x tile and
    # every matmul / store are fully dense (no vst.msk).
    b_pad = _round_up(max(B, _BF16_SUBLANES), _BF16_SUBLANES)
    x_pad = jnp.pad(x_flat, ((0, b_pad - B), (0, 0))).astype(jnp.bfloat16)

    vmem = pltpu.MemorySpace.VMEM
    smem = pltpu.MemorySpace.SMEM

    out_pad = pl.pallas_call(
        combined_kernel,
        out_shape=jax.ShapeDtypeStruct((b_pad, c_pad), jnp.float32),
        in_specs=[
            pl.BlockSpec(memory_space=vmem),   # x        (Bp, D_in)   bf16
            pl.BlockSpec(memory_space=vmem),   # w1       (D_in, H)    bf16
            pl.BlockSpec(memory_space=vmem),   # b1       (1, H)       f32
            pl.BlockSpec(memory_space=vmem),   # w2       (H, L)       bf16
            pl.BlockSpec(memory_space=vmem),   # b2       (1, L)       f32
            pl.BlockSpec(memory_space=smem),   # conv w+b (CC, K+1)    scalars
            pl.BlockSpec(memory_space=vmem),   # w3       (CC*L, Cpad) bf16
            pl.BlockSpec(memory_space=vmem),   # b3       (1, Cpad)    f32
        ],
        out_specs=pl.BlockSpec(memory_space=vmem),
    )(x_pad, w1_bf16, b1, w2_bf16, b2, wcb, w3_pad, b3_pad)

    return out_pad[:B, :num_classes]


# -------------------------- parameter construction ------------------------ #
def make_params(key, d_in, hidden, latent, conv_ch, kernel, num_classes):
    ks = jax.random.split(key, 8)
    w1 = jax.random.normal(ks[0], (d_in, hidden), jnp.float32) * 0.02
    b1 = jax.random.normal(ks[1], (1, hidden), jnp.float32) * 0.01
    w2 = jax.random.normal(ks[2], (hidden, latent), jnp.float32) * 0.05
    b2 = jax.random.normal(ks[3], (1, latent), jnp.float32) * 0.01
    # torch.nn.Conv1d(1, conv_ch, kernel_size=3, padding=1): weight (CC,1,K), bias (CC,)
    wc = jax.random.normal(ks[4], (conv_ch, 1, kernel), jnp.float32) * 0.1
    bc = jax.random.normal(ks[5], (conv_ch,), jnp.float32) * 0.01
    w3 = jax.random.normal(ks[6], (conv_ch * latent, num_classes),
                           jnp.float32) * 0.05
    b3 = jax.random.normal(ks[7], (1, num_classes), jnp.float32) * 0.01
    return w1, b1, w2, b2, wc, bc, w3, b3


def reference_forward(x_nchw, params):
    """Pure-JAX (f32) reference of the same composition, for sanity checking."""
    w1, b1, w2, b2, wc, bc, w3, b3 = params
    B = x_nchw.shape[0]
    x = x_nchw.reshape(B, -1).astype(jnp.float32)
    h = jnp.maximum(x @ w1 + b1, 0.0)
    z = jnp.maximum(h @ w2 + b2, 0.0)                 # (B, L)
    zin = z[:, None, :]                               # unsqueeze(1) -> (B, 1, L)
    conv = jax.lax.conv_general_dilated(
        zin, wc, window_strides=(1,), padding=((1, 1),),
        dimension_numbers=("NCH", "OIH", "NCH"))      # (B, CC, L)
    conv = jnp.maximum(conv + bc[None, :, None], 0.0)
    c = conv.reshape(B, -1)                           # torch flatten (channel-major)
    return c @ w3 + b3


# --------------------------------- main ------------------------------------ #
if __name__ == "__main__":
    B, C, H, W = 2, 4, 16, 16                 # NCHW input, like PyTorch
    HIDDEN, LATENT = 128, 128                 # lane-dense encoder dims
    CONV_CH, KERNEL, NUM_CLASSES = 4, 3, 10

    key = jax.random.PRNGKey(0)
    kx, kp = jax.random.split(key)
    x = jax.random.normal(kx, (B, C, H, W), jnp.float32)
    params = make_params(kp, C * H * W, HIDDEN, LATENT,
                         CONV_CH, KERNEL, NUM_CLASSES)

    # One-time weight preprocessing, outside the per-call hot path.
    prepped = prepare_params(params, NUM_CLASSES)

    fwd = jax.jit(combined_forward, static_argnums=(2,))
    out = fwd(x, prepped, NUM_CLASSES)
    out = jax.block_until_ready(out)

    ref = reference_forward(x, params)
    assert out.shape == (B, NUM_CLASSES)
    # x / w1 / w2 / w3 run in bf16 on the MXU (f32 accumulate) -> loose tolerance.
    assert jnp.allclose(out, ref, atol=2e-2, rtol=2e-2), \
        float(jnp.max(jnp.abs(out - ref)))

    print("KERNEL_OK")
</pallas_src>

<mosaic_0001>
module attributes {stable_mosaic.version = 11 : i64} {
  func.func @combined_kernel(%arg0: memref<16x1024xbf16, #tpu.memory_space<vmem>>, %arg1: memref<1024x128xbf16, #tpu.memory_space<vmem>>, %arg2: memref<1x128xf32, #tpu.memory_space<vmem>>, %arg3: memref<128x128xbf16, #tpu.memory_space<vmem>>, %arg4: memref<1x128xf32, #tpu.memory_space<vmem>>, %arg5: memref<4x4xf32, #tpu.memory_space<smem>>, %arg6: memref<512x128xbf16, #tpu.memory_space<vmem>>, %arg7: memref<1x128xf32, #tpu.memory_space<vmem>>, %arg8: memref<16x128xf32, #tpu.memory_space<vmem>>) attributes {dimension_semantics = [], scalar_prefetch = 0 : i64, scratch_operands = 0 : i64, tpu.core_type = #tpu.core_type<tc>} {
    %c0 = arith.constant 0 : index
    %c0_0 = arith.constant 0 : index
    %0 = vector.load %arg0[%c0, %c0_0] : memref<16x1024xbf16, #tpu.memory_space<vmem>>, vector<16x1024xbf16>
    %c0_1 = arith.constant 0 : index
    %c0_2 = arith.constant 0 : index
    %1 = vector.load %arg1[%c0_1, %c0_2] : memref<1024x128xbf16, #tpu.memory_space<vmem>>, vector<1024x128xbf16>
    %cst = arith.constant dense<0.000000e+00> : vector<16x128xf32>
    %2 = tpu.matmul %0, %1, %cst {dimension_numbers = #tpu.dot_dimension_numbers<[1], [0], [0], [1], [0, 0, 1, 1], [], []>} : vector<16x1024xbf16>, vector<1024x128xbf16>, vector<16x128xf32> -> vector<16x128xf32>
    %c0_3 = arith.constant 0 : index
    %c0_4 = arith.constant 0 : index
    %3 = vector.load %arg2[%c0_3, %c0_4] : memref<1x128xf32, #tpu.memory_space<vmem>>, vector<1x128xf32>
    %4 = vector.broadcast %3 : vector<1x128xf32> to vector<16x128xf32>
    %5 = arith.addf %2, %4 : vector<16x128xf32>
    %cst_5 = arith.constant 0.000000e+00 : f32
    %6 = vector.broadcast %cst_5 : f32 to vector<16x128xf32>
    %7 = arith.maximumf %5, %6 : vector<16x128xf32>
    %8 = arith.truncf %7 : vector<16x128xf32> to vector<16x128xbf16>
    %c0_6 = arith.constant 0 : index
    %c0_7 = arith.constant 0 : index
    %9 = vector.load %arg3[%c0_6, %c0_7] : memref<128x128xbf16, #tpu.memory_space<vmem>>, vector<128x128xbf16>
    %cst_8 = arith.constant dense<0.000000e+00> : vector<16x128xf32>
    %10 = tpu.matmul %8, %9, %cst_8 {dimension_numbers = #tpu.dot_dimension_numbers<[1], [0], [0], [1], [0, 0, 1, 1], [], []>} : vector<16x128xbf16>, vector<128x128xbf16>, vector<16x128xf32> -> vector<16x128xf32>
    %c0_9 = arith.constant 0 : index
    %c0_10 = arith.constant 0 : index
    %11 = vector.load %arg4[%c0_9, %c0_10] : memref<1x128xf32, #tpu.memory_space<vmem>>, vector<1x128xf32>
    %12 = vector.broadcast %11 : vector<1x128xf32> to vector<16x128xf32>
    %13 = arith.addf %10, %12 : vector<16x128xf32>
    %cst_11 = arith.constant 0.000000e+00 : f32
    %14 = vector.broadcast %cst_11 : f32 to vector<16x128xf32>
    %15 = arith.maximumf %13, %14 : vector<16x128xf32>
    %16 = tpu.iota {dimensions = array<i32: 1>} : vector<16x128xi32>
    %c0_i32 = arith.constant 0 : i32
    %17 = vector.broadcast %c0_i32 : i32 to vector<16x128xi32>
    %18 = arith.cmpi eq, %16, %17 : vector<16x128xi32>
    %c1_i32 = arith.constant 1 : i32
    %19 = tpu.dynamic_rotate %15 by %c1_i32 dim 1 : vector<16x128xf32>, i32 -> vector<16x128xf32>
    %cst_12 = arith.constant 0.000000e+00 : f32
    %20 = vector.broadcast %cst_12 : f32 to vector<16x128xf32>
    %21 = arith.select %18, %20, %19 : vector<16x128xi1>, vector<16x128xf32>
    %c127_i32 = arith.constant 127 : i32
    %22 = vector.broadcast %c127_i32 : i32 to vector<16x128xi32>
    %23 = arith.cmpi eq, %16, %22 : vector<16x128xi32>
    %c127_i32_13 = arith.constant 127 : i32
    %24 = tpu.dynamic_rotate %15 by %c127_i32_13 dim 1 : vector<16x128xf32>, i32 -> vector<16x128xf32>
    %cst_14 = arith.constant 0.000000e+00 : f32
    %25 = vector.broadcast %cst_14 : f32 to vector<16x128xf32>
    %26 = arith.select %23, %25, %24 : vector<16x128xi1>, vector<16x128xf32>
    %c0_15 = arith.constant 0 : index
    %c0_16 = arith.constant 0 : index
    %27 = memref.load %arg5[%c0_15, %c0_16] : memref<4x4xf32, #tpu.memory_space<smem>>
    %28 = vector.broadcast %27 : f32 to vector<16x128xf32>
    %29 = arith.mulf %21, %28 : vector<16x128xf32>
    %c0_17 = arith.constant 0 : index
    %c1 = arith.constant 1 : index
    %30 = memref.load %arg5[%c0_17, %c1] : memref<4x4xf32, #tpu.memory_space<smem>>
    %31 = vector.broadcast %30 : f32 to vector<16x128xf32>
    %32 = arith.mulf %15, %31 : vector<16x128xf32>
    %33 = arith.addf %29, %32 : vector<16x128xf32>
    %c0_18 = arith.constant 0 : index
    %c2 = arith.constant 2 : index
    %34 = memref.load %arg5[%c0_18, %c2] : memref<4x4xf32, #tpu.memory_space<smem>>
    %35 = vector.broadcast %34 : f32 to vector<16x128xf32>
    %36 = arith.mulf %26, %35 : vector<16x128xf32>
    %37 = arith.addf %33, %36 : vector<16x128xf32>
    %c0_19 = arith.constant 0 : index
    %c3 = arith.constant 3 : index
    %38 = memref.load %arg5[%c0_19, %c3] : memref<4x4xf32, #tpu.memory_space<smem>>
    %39 = vector.broadcast %38 : f32 to vector<16x128xf32>
    %40 = arith.addf %37, %39 : vector<16x128xf32>
    %cst_20 = arith.constant 0.000000e+00 : f32
    %41 = vector.broadcast %cst_20 : f32 to vector<16x128xf32>
    %42 = arith.maximumf %40, %41 : vector<16x128xf32>
    %43 = arith.truncf %42 : vector<16x128xf32> to vector<16x128xbf16>
    %c1_21 = arith.constant 1 : index
    %c0_22 = arith.constant 0 : index
    %44 = memref.load %arg5[%c1_21, %c0_22] : memref<4x4xf32, #tpu.memory_space<smem>>
    %45 = vector.broadcast %44 : f32 to vector<16x128xf32>
    %46 = arith.mulf %21, %45 : vector<16x128xf32>
    %c1_23 = arith.constant 1 : index
    %c1_24 = arith.constant 1 : index
    %47 = memref.load %arg5[%c1_23, %c1_24] : memref<4x4xf32, #tpu.memory_space<smem>>
    %48 = vector.broadcast %47 : f32 to vector<16x128xf32>
    %49 = arith.mulf %15, %48 : vector<16x128xf32>
    %50 = arith.addf %46, %49 : vector<16x128xf32>
    %c1_25 = arith.constant 1 : index
    %c2_26 = arith.constant 2 : index
    %51 = memref.load %arg5[%c1_25, %c2_26] : memref<4x4xf32, #tpu.memory_space<smem>>
    %52 = vector.broadcast %51 : f32 to vector<16x128xf32>
    %53 = arith.mulf %26, %52 : vector<16x128xf32>
    %54 = arith.addf %50, %53 : vector<16x128xf32>
    %c1_27 = arith.constant 1 : index
    %c3_28 = arith.constant 3 : index
    %55 = memref.load %arg5[%c1_27, %c3_28] : memref<4x4xf32, #tpu.memory_space<smem>>
    %56 = vector.broadcast %55 : f32 to vector<16x128xf32>
    %57 = arith.addf %54, %56 : vector<16x128xf32>
    %cst_29 = arith.constant 0.000000e+00 : f32
    %58 = vector.broadcast %cst_29 : f32 to vector<16x128xf32>
    %59 = arith.maximumf %57, %58 : vector<16x128xf32>
    %60 = arith.truncf %59 : vector<16x128xf32> to vector<16x128xbf16>
    %c2_30 = arith.constant 2 : index
    %c0_31 = arith.constant 0 : index
    %61 = memref.load %arg5[%c2_30, %c0_31] : memref<4x4xf32, #tpu.memory_space<smem>>
    %62 = vector.broadcast %61 : f32 to vector<16x128xf32>
    %63 = arith.mulf %21, %62 : vector<16x128xf32>
    %c2_32 = arith.constant 2 : index
    %c1_33 = arith.constant 1 : index
    %64 = memref.load %arg5[%c2_32, %c1_33] : memref<4x4xf32, #tpu.memory_space<smem>>
    %65 = vector.broadcast %64 : f32 to vector<16x128xf32>
    %66 = arith.mulf %15, %65 : vector<16x128xf32>
    %67 = arith.addf %63, %66 : vector<16x128xf32>
    %c2_34 = arith.constant 2 : index
    %c2_35 = arith.constant 2 : index
    %68 = memref.load %arg5[%c2_34, %c2_35] : memref<4x4xf32, #tpu.memory_space<smem>>
    %69 = vector.broadcast %68 : f32 to vector<16x128xf32>
    %70 = arith.mulf %26, %69 : vector<16x128xf32>
    %71 = arith.addf %67, %70 : vector<16x128xf32>
    %c2_36 = arith.constant 2 : index
    %c3_37 = arith.constant 3 : index
    %72 = memref.load %arg5[%c2_36, %c3_37] : memref<4x4xf32, #tpu.memory_space<smem>>
    %73 = vector.broadcast %72 : f32 to vector<16x128xf32>
    %74 = arith.addf %71, %73 : vector<16x128xf32>
    %cst_38 = arith.constant 0.000000e+00 : f32
    %75 = vector.broadcast %cst_38 : f32 to vector<16x128xf32>
    %76 = arith.maximumf %74, %75 : vector<16x128xf32>
    %77 = arith.truncf %76 : vector<16x128xf32> to vector<16x128xbf16>
    %c3_39 = arith.constant 3 : index
    %c0_40 = arith.constant 0 : index
    %78 = memref.load %arg5[%c3_39, %c0_40] : memref<4x4xf32, #tpu.memory_space<smem>>
    %79 = vector.broadcast %78 : f32 to vector<16x128xf32>
    %80 = arith.mulf %21, %79 : vector<16x128xf32>
    %c3_41 = arith.constant 3 : index
    %c1_42 = arith.constant 1 : index
    %81 = memref.load %arg5[%c3_41, %c1_42] : memref<4x4xf32, #tpu.memory_space<smem>>
    %82 = vector.broadcast %81 : f32 to vector<16x128xf32>
    %83 = arith.mulf %15, %82 : vector<16x128xf32>
    %84 = arith.addf %80, %83 : vector<16x128xf32>
    %c3_43 = arith.constant 3 : index
    %c2_44 = arith.constant 2 : index
    %85 = memref.load %arg5[%c3_43, %c2_44] : memref<4x4xf32, #tpu.memory_space<smem>>
    %86 = vector.broadcast %85 : f32 to vector<16x128xf32>
    %87 = arith.mulf %26, %86 : vector<16x128xf32>
    %88 = arith.addf %84, %87 : vector<16x128xf32>
    %c3_45 = arith.constant 3 : index
    %c3_46 = arith.constant 3 : index
    %89 = memref.load %arg5[%c3_45, %c3_46] : memref<4x4xf32, #tpu.memory_space<smem>>
    %90 = vector.broadcast %89 : f32 to vector<16x128xf32>
    %91 = arith.addf %88, %90 : vector<16x128xf32>
    %cst_47 = arith.constant 0.000000e+00 : f32
    %92 = vector.broadcast %cst_47 : f32 to vector<16x128xf32>
    %93 = arith.maximumf %91, %92 : vector<16x128xf32>
    %94 = arith.truncf %93 : vector<16x128xf32> to vector<16x128xbf16>
    %95 = tpu.concatenate %43, %60, %77, %94 in 1 : vector<16x128xbf16>, vector<16x128xbf16>, vector<16x128xbf16>, vector<16x128xbf16> -> vector<16x512xbf16>
    %c0_48 = arith.constant 0 : index
    %c0_49 = arith.constant 0 : index
    %96 = vector.load %arg6[%c0_48, %c0_49] : memref<512x128xbf16, #tpu.memory_space<vmem>>, vector<512x128xbf16>
    %cst_50 = arith.constant dense<0.000000e+00> : vector<16x128xf32>
    %97 = tpu.matmul %95, %96, %cst_50 {dimension_numbers = #tpu.dot_dimension_numbers<[1], [0], [0], [1], [0, 0, 1, 1], [], []>} : vector<16x512xbf16>, vector<512x128xbf16>, vector<16x128xf32> -> vector<16x128xf32>
    %c0_51 = arith.constant 0 : index
    %c0_52 = arith.constant 0 : index
    %98 = vector.load %arg7[%c0_51, %c0_52] : memref<1x128xf32, #tpu.memory_space<vmem>>, vector<1x128xf32>
    %99 = vector.broadcast %98 : vector<1x128xf32> to vector<16x128xf32>
    %100 = arith.addf %97, %99 : vector<16x128xf32>
    %c0_53 = arith.constant 0 : index
    %c0_54 = arith.constant 0 : index
    %101 = vector.load %arg8[%c0_53, %c0_54] : memref<16x128xf32, #tpu.memory_space<vmem>>, vector<16x128xf32>
    tpu.vector_store %arg8[%c0_53, %c0_54], %100 {strides = array<i32>} : memref<16x128xf32, #tpu.memory_space<vmem>>, vector<16x128xf32>,
    return
  }
}

</mosaic_0001>

<llo_original>
// kernel: combined_forward.1
$region0: #{combined_forward.1}
  #allocation0 [shape = 'u32[]', space=smem, size = 0x4, offset = 0x4, fixed_abs, tag = 'smem constant byte address 0x4 - core index']
  #allocation1 [shape = 'u32[144,128]{1,0:T(1,128)}', space=vmem, size = 0x12000, scoped, tag = 'internal scratch']
  %s0 = inlined_call_operand.vmem [shape: bf16[16,1024], index: 0, kind: input, shape index: {}]
  %s1 = inlined_call_operand.hbm [shape: bf16[1024,128], index: 1, kind: input, shape index: {}]
  %s2 = inlined_call_operand.vmem [shape: f32[1,128], index: 2, kind: input, shape index: {}]
  %s3 = inlined_call_operand.vmem [shape: bf16[128,128], index: 3, kind: input, shape index: {}]
  %s4 = inlined_call_operand.vmem [shape: f32[1,128], index: 4, kind: input, shape index: {}]
  %s5 = inlined_call_operand.vmem [shape: f32[4,4], index: 5, kind: input, shape index: {}]
  %s6 = inlined_call_operand.vmem [shape: bf16[512,128], index: 6, kind: input, shape index: {}]
  %s7 = inlined_call_operand.vmem [shape: f32[1,128], index: 7, kind: input, shape index: {}]
  %s8 = inlined_call_operand.vmem [shape: f32[16,128], index: 8, kind: output, shape index: {}]
  %s9 = sld [smem:[#allocation0]]
  $region50: #{combined_forward.1} parent=0
    _
  %s11 = ssub.s32 1, %s9
  %s12 = scalar_select 0, %s11, %s9
  $region1: #{combined_forward.1} parent=0
    #allocation2 [shape = 'u8[262144]{0}', space=vmem, size = 0x40000, scoped, tag = 'input window, operand 1, single buffered']
    #allocation3 [shape = 's32[1]{0}', space=sflag, size = 0x4, scoped, tag = 'scoped memory for combined_forward.1']
    #allocation4 [shape = 's32[1]{0}', space=sflag, size = 0x4, scoped, tag = 'scoped memory for combined_forward.1']
    #allocation5 [shape = 'u8[2048]{0}', space=smem, size = 0x800, scoped, tag = 'input window, operand 5, single buffered']
    %13 = vsyncpa [#allocation3], 0
    %14 = vsyncpa [#allocation4], 0
    // Predicated region
    $region2: #{combined_forward.1} parent=1 // pred_check
      _
    $region3: #{combined_forward.1} parent=1 // pred_check_branch
      %16 = sbr.rel (0) target = $region5
    $region4: #{combined_forward.1} parent=1 // pred_region
      _
    $region5: #{combined_forward.1} parent=1 // pred_fallthru
      _
    // Predicated region
    $region6: #{combined_forward.1} parent=1 // pred_check
      _
    $region7: #{combined_forward.1} parent=1 // pred_check_branch
      %18 = sbr.rel (0) target = $region9
    $region8: #{combined_forward.1} parent=1 // pred_region
      %s20 = ssub.s32 8192, 8192
      %21 = vsyncadd [#allocation3], %s20
      %s22 = sshll.u32 [#allocation2], 4
      %s23 = int_to_ptr.vmem [resolvable:$true] %s22
      %28 = dma.hbm_to_vmem [thread:$0]  %s1, 8192, %s23, [#allocation3], 64, 64, 4
    $region9: #{combined_forward.1} parent=1 // pred_fallthru
      _
    // Predicated region
    $region10: #{combined_forward.1} parent=1 // pred_check
      _
    $region11: #{combined_forward.1} parent=1 // pred_check_branch
      %30 = sbr.rel (0) target = $region13
    $region12: #{combined_forward.1} parent=1 // pred_region
      _
    $region13: #{combined_forward.1} parent=1 // pred_fallthru
      _
    // Predicated region
    $region14: #{combined_forward.1} parent=1 // pred_check
      _
    $region15: #{combined_forward.1} parent=1 // pred_check_branch
      %32 = sbr.rel (0) target = $region17
    $region16: #{combined_forward.1} parent=1 // pred_region
      _
    $region17: #{combined_forward.1} parent=1 // pred_fallthru
      _
    // Predicated region
    $region18: #{combined_forward.1} parent=1 // pred_check
      _
    $region19: #{combined_forward.1} parent=1 // pred_check_branch
      %34 = sbr.rel (0) target = $region21
    $region20: #{combined_forward.1} parent=1 // pred_region
      _
    $region21: #{combined_forward.1} parent=1 // pred_fallthru
      _
    // Predicated region
    $region22: #{combined_forward.1} parent=1 // pred_check
      _
    $region23: #{combined_forward.1} parent=1 // pred_check_branch
      %36 = sbr.rel (0) target = $region25
    $region24: #{combined_forward.1} parent=1 // pred_region
      %s38 = ssub.s32 64, 64
      %39 = vsyncadd [#allocation4], %s38
      %s41 = sshll.u32 %s5, 4
      %s42 = int_to_ptr.vmem [resolvable:$true] %s41
      %44 = dma.vmem_to_smem %s42, 64, [#allocation5], [#allocation4]
    $region25: #{combined_forward.1} parent=1 // pred_fallthru
      _
    // Predicated region
    $region26: #{combined_forward.1} parent=1 // pred_check
      _
    $region27: #{combined_forward.1} parent=1 // pred_check_branch
      %46 = sbr.rel (0) target = $region29
    $region28: #{combined_forward.1} parent=1 // pred_region
      _
    $region29: #{combined_forward.1} parent=1 // pred_fallthru
      _
    // Predicated region
    $region30: #{combined_forward.1} parent=1 // pred_check
      _
    $region31: #{combined_forward.1} parent=1 // pred_check_branch
      %48 = sbr.rel (0) target = $region33
    $region32: #{combined_forward.1} parent=1 // pred_region
      _
    $region33: #{combined_forward.1} parent=1 // pred_fallthru
      _
    // Predicated region
    $region34: #{combined_forward.1} parent=1 // pred_check
      _
    $region35: #{combined_forward.1} parent=1 // pred_check_branch
      %50 = sbr.rel (0) target = $region37
    $region36: #{combined_forward.1} parent=1 // pred_region
      %51 = dma.done [#allocation3], 8192
    $region37: #{combined_forward.1} parent=1 // pred_fallthru
      _
    // Predicated region
    $region38: #{combined_forward.1} parent=1 // pred_check
      _
    $region39: #{combined_forward.1} parent=1 // pred_check_branch
      %53 = sbr.rel (0) target = $region41
    $region40: #{combined_forward.1} parent=1 // pred_region
      %54 = dma.done [#allocation4], 64
    $region41: #{combined_forward.1} parent=1 // pred_fallthru
      _
    %55 = sfence
    %v57 = vld [vmem:[%s0] sm:$0xff]
    %v58 = vld [vmem:[%s0 + $0x8] sm:$0xff]
    %v59 = vld [vmem:[%s0 + $0x10] sm:$0xff]
    %v60 = vld [vmem:[%s0 + $0x18] sm:$0xff]
    %v61 = vld [vmem:[%s0 + $0x20] sm:$0xff]
    %v62 = vld [vmem:[%s0 + $0x28] sm:$0xff]
    %v63 = vld [vmem:[%s0 + $0x30] sm:$0xff]
    %v64 = vld [vmem:[%s0 + $0x38] sm:$0xff]
    %v65 = vld [vmem:[#allocation2] sm:$0xf]
    %v66 = vld [vmem:[#allocation2 + $0x4] sm:$0xf]
    %v67 = vld [vmem:[#allocation2 + $0x8] sm:$0xf]
    %v68 = vld [vmem:[#allocation2 + $0xc] sm:$0xf]
    %v69 = vld [vmem:[#allocation2 + $0x10] sm:$0xf]
    %v70 = vld [vmem:[#allocation2 + $0x14] sm:$0xf]
    %v71 = vld [vmem:[#allocation2 + $0x18] sm:$0xf]
    %v72 = vld [vmem:[#allocation2 + $0x1c] sm:$0xf]
    %v73 = vld [vmem:[#allocation2 + $0x20] sm:$0xf]
    %v74 = vld [vmem:[#allocation2 + $0x24] sm:$0xf]
    %v75 = vld [vmem:[#allocation2 + $0x28] sm:$0xf]
    %v76 = vld [vmem:[#allocation2 + $0x2c] sm:$0xf]
    %v77 = vld [vmem:[#allocation2 + $0x30] sm:$0xf]
    %v78 = vld [vmem:[#allocation2 + $0x34] sm:$0xf]
    %v79 = vld [vmem:[#allocation2 + $0x38] sm:$0xf]
    %v80 = vld [vmem:[#allocation2 + $0x3c] sm:$0xf]
    %v81 = vld [vmem:[#allocation2 + $0x40] sm:$0xf]
    %v82 = vld [vmem:[#allocation2 + $0x44] sm:$0xf]
    %v83 = vld [vmem:[#allocation2 + $0x48] sm:$0xf]
    %v84 = vld [vmem:[#allocation2 + $0x4c] sm:$0xf]
    %v85 = vld [vmem:[#allocation2 + $0x50] sm:$0xf]
    %v86 = vld [vmem:[#allocation2 + $0x54] sm:$0xf]
    %v87 = vld [vmem:[#allocation2 + $0x58] sm:$0xf]
    %v88 = vld [vmem:[#allocation2 + $0x5c] sm:$0xf]
    %v89 = vld [vmem:[#allocation2 + $0x60] sm:$0xf]
    %v90 = vld [vmem:[#allocation2 + $0x64] sm:$0xf]
    %v91 = vld [vmem:[#allocation2 + $0x68] sm:$0xf]
    %v92 = vld [vmem:[#allocation2 + $0x6c] sm:$0xf]
    %v93 = vld [vmem:[#allocation2 + $0x70] sm:$0xf]
    %v94 = vld [vmem:[#allocation2 + $0x74] sm:$0xf]
    %v95 = vld [vmem:[#allocation2 + $0x78] sm:$0xf]
    %v96 = vld [vmem:[#allocation2 + $0x7c] sm:$0xf]
    %v97 = vld [vmem:[#allocation2 + $0x80] sm:$0xf]
    %v98 = vld [vmem:[#allocation2 + $0x84] sm:$0xf]
    %v99 = vld [vmem:[#allocation2 + $0x88] sm:$0xf]
    %v100 = vld [vmem:[#allocation2 + $0x8c] sm:$0xf]
    %v101 = vld [vmem:[#allocation2 + $0x90] sm:$0xf]
    %v102 = vld [vmem:[#allocation2 + $0x94] sm:$0xf]
    %v103 = vld [vmem:[#allocation2 + $0x98] sm:$0xf]
    %v104 = vld [vmem:[#allocation2 + $0x9c] sm:$0xf]
    %v105 = vld [vmem:[#allocation2 + $0xa0] sm:$0xf]
    %v106 = vld [vmem:[#allocation2 + $0xa4] sm:$0xf]
    %v107 = vld [vmem:[#allocation2 + $0xa8] sm:$0xf]
    %v108 = vld [vmem:[#allocation2 + $0xac] sm:$0xf]
    %v109 = vld [vmem:[#allocation2 + $0xb0] sm:$0xf]
    %v110 = vld [vmem:[#allocation2 + $0xb4] sm:$0xf]
    %v111 = vld [vmem:[#allocation2 + $0xb8] sm:$0xf]
    %v112 = vld [vmem:[#allocation2 + $0xbc] sm:$0xf]
    %v113 = vld [vmem:[#allocation2 + $0xc0] sm:$0xf]
    %v114 = vld [vmem:[#allocation2 + $0xc4] sm:$0xf]
    %v115 = vld [vmem:[#allocation2 + $0xc8] sm:$0xf]
    %v116 = vld [vmem:[#allocation2 + $0xcc] sm:$0xf]
    %v117 = vld [vmem:[#allocation2 + $0xd0] sm:$0xf]
    %v118 = vld [vmem:[#allocation2 + $0xd4] sm:$0xf]
    %v119 = vld [vmem:[#allocation2 + $0xd8] sm:$0xf]
    %v120 = vld [vmem:[#allocation2 + $0xdc] sm:$0xf]
    %v121 = vld [vmem:[#allocation2 + $0xe0] sm:$0xf]
    %v122 = vld [vmem:[#allocation2 + $0xe4] sm:$0xf]
    %v123 = vld [vmem:[#allocation2 + $0xe8] sm:$0xf]
    %v124 = vld [vmem:[#allocation2 + $0xec] sm:$0xf]
    %v125 = vld [vmem:[#allocation2 + $0xf0] sm:$0xf]
    %v126 = vld [vmem:[#allocation2 + $0xf4] sm:$0xf]
    %v127 = vld [vmem:[#allocation2 + $0xf8] sm:$0xf]
    %v128 = vld [vmem:[#allocation2 + $0xfc] sm:$0xf]
    %v129 = vld [vmem:[#allocation2 + $0x100] sm:$0xf]
    %v130 = vld [vmem:[#allocation2 + $0x104] sm:$0xf]
    %v131 = vld [vmem:[#allocation2 + $0x108] sm:$0xf]
    %v132 = vld [vmem:[#allocation2 + $0x10c] sm:$0xf]
    %v133 = vld [vmem:[#allocation2 + $0x110] sm:$0xf]
    %v134 = vld [vmem:[#allocation2 + $0x114] sm:$0xf]
    %v135 = vld [vmem:[#allocation2 + $0x118] sm:$0xf]
    %v136 = vld [vmem:[#allocation2 + $0x11c] sm:$0xf]
    %v137 = vld [vmem:[#allocation2 + $0x120] sm:$0xf]
    %v138 = vld [vmem:[#allocation2 + $0x124] sm:$0xf]
    %v139 = vld [vmem:[#allocation2 + $0x128] sm:$0xf]
    %v140 = vld [vmem:[#allocation2 + $0x12c] sm:$0xf]
    %v141 = vld [vmem:[#allocation2 + $0x130] sm:$0xf]
    %v142 = vld [vmem:[#allocation2 + $0x134] sm:$0xf]
    %v143 = vld [vmem:[#allocation2 + $0x138] sm:$0xf]
    %v144 = vld [vmem:[#allocation2 + $0x13c] sm:$0xf]
    %v145 = vld [vmem:[#allocation2 + $0x140] sm:$0xf]
    %v146 = vld [vmem:[#allocation2 + $0x144] sm:$0xf]
    %v147 = vld [vmem:[#allocation2 + $0x148] sm:$0xf]
    %v148 = vld [vmem:[#allocation2 + $0x14c] sm:$0xf]
    %v149 = vld [vmem:[#allocation2 + $0x150] sm:$0xf]
    %v150 = vld [vmem:[#allocation2 + $0x154] sm:$0xf]
    %v151 = vld [vmem:[#allocation2 + $0x158] sm:$0xf]
    %v152 = vld [vmem:[#allocation2 + $0x15c] sm:$0xf]
    %v153 = vld [vmem:[#allocation2 + $0x160] sm:$0xf]
    %v154 = vld [vmem:[#allocation2 + $0x164] sm:$0xf]
    %v155 = vld [vmem:[#allocation2 + $0x168] sm:$0xf]
    %v156 = vld [vmem:[#allocation2 + $0x16c] sm:$0xf]
    %v157 = vld [vmem:[#allocation2 + $0x170] sm:$0xf]
    %v158 = vld [vmem:[#allocation2 + $0x174] sm:$0xf]
    %v159 = vld [vmem:[#allocation2 + $0x178] sm:$0xf]
    %v160 = vld [vmem:[#allocation2 + $0x17c] sm:$0xf]
    %v161 = vld [vmem:[#allocation2 + $0x180] sm:$0xf]
    %v162 = vld [vmem:[#allocation2 + $0x184] sm:$0xf]
    %v163 = vld [vmem:[#allocation2 + $0x188] sm:$0xf]
    %v164 = vld [vmem:[#allocation2 + $0x18c] sm:$0xf]
    %v165 = vld [vmem:[#allocation2 + $0x190] sm:$0xf]
    %v166 = vld [vmem:[#allocation2 + $0x194] sm:$0xf]
    %v167 = vld [vmem:[#allocation2 + $0x198] sm:$0xf]
    %v168 = vld [vmem:[#allocation2 + $0x19c] sm:$0xf]
    %v169 = vld [vmem:[#allocation2 + $0x1a0] sm:$0xf]
    %v170 = vld [vmem:[#allocation2 + $0x1a4] sm:$0xf]
    %v171 = vld [vmem:[#allocation2 + $0x1a8] sm:$0xf]
    %v172 = vld [vmem:[#allocation2 + $0x1ac] sm:$0xf]
    %v173 = vld [vmem:[#allocation2 + $0x1b0] sm:$0xf]
    %v174 = vld [vmem:[#allocation2 + $0x1b4] sm:$0xf]
    %v175 = vld [vmem:[#allocation2 + $0x1b8] sm:$0xf]
    %v176 = vld [vmem:[#allocation2 + $0x1bc] sm:$0xf]
    %v177 = vld [vmem:[#allocation2 + $0x1c0] sm:$0xf]
    %v178 = vld [vmem:[#allocation2 + $0x1c4] sm:$0xf]
    %v179 = vld [vmem:[#allocation2 + $0x1c8] sm:$0xf]
    %v180 = vld [vmem:[#allocation2 + $0x1cc] sm:$0xf]
    %v181 = vld [vmem:[#allocation2 + $0x1d0] sm:$0xf]
    %v182 = vld [vmem:[#allocation2 + $0x1d4] sm:$0xf]
    %v183 = vld [vmem:[#allocation2 + $0x1d8] sm:$0xf]
    %v184 = vld [vmem:[#allocation2 + $0x1dc] sm:$0xf]
    %v185 = vld [vmem:[#allocation2 + $0x1e0] sm:$0xf]
    %v186 = vld [vmem:[#allocation2 + $0x1e4] sm:$0xf]
    %v187 = vld [vmem:[#allocation2 + $0x1e8] sm:$0xf]
    %v188 = vld [vmem:[#allocation2 + $0x1ec] sm:$0xf]
    %v189 = vld [vmem:[#allocation2 + $0x1f0] sm:$0xf]
    %v190 = vld [vmem:[#allocation2 + $0x1f4] sm:$0xf]
    %v191 = vld [vmem:[#allocation2 + $0x1f8] sm:$0xf]
    %v192 = vld [vmem:[#allocation2 + $0x1fc] sm:$0xf]
    %v193 = vld [vmem:[%s2] sm:$0x1]
    %v195 = vlaneseq
    %v196 = vshrl.u32 %v195, 7
    %v197 = vsub.s32 0, %v196
    %v198 = vrot.slane %v193, %v197
    %v208 = vunpack.c.l.b16 %v57
    %v209 = vunpack.c.h.b16 %v57
    %v210 = vunpack.c.l.b16 %v58
    %v211 = vunpack.c.h.b16 %v58
    %v212 = vunpack.c.l.b16 %v59
    %v213 = vunpack.c.h.b16 %v59
    %v214 = vunpack.c.l.b16 %v60
    %v215 = vunpack.c.h.b16 %v60
    %v216 = vunpack.c.l.b16 %v61
    %v217 = vunpack.c.h.b16 %v61
    %v218 = vunpack.c.l.b16 %v62
    %v219 = vunpack.c.h.b16 %v62
    %v220 = vunpack.c.l.b16 %v63
    %v221 = vunpack.c.h.b16 %v63
    %v222 = vunpack.c.l.b16 %v64
    %v223 = vunpack.c.h.b16 %v64
    %v224 = vpack.c.b16 %v216, %v208
    %v225 = vpack.c.b16 %v217, %v209
    %v226 = vpack.c.b16 %v218, %v210
    %v227 = vpack.c.b16 %v219, %v211
    %v228 = vpack.c.b16 %v220, %v212
    %v229 = vpack.c.b16 %v221, %v213
    %v230 = vpack.c.b16 %v222, %v214
    %v231 = vpack.c.b16 %v223, %v215
    %v368 = vunpack.c.l.b16 %v65
    %v369 = vunpack.c.l.b16 %v66
    %v370 = vunpack.c.l.b16 %v67
    %v371 = vunpack.c.l.b16 %v68
    %v372 = vunpack.c.l.b16 %v69
    %v373 = vunpack.c.l.b16 %v70
    %v374 = vunpack.c.l.b16 %v71
    %v375 = vunpack.c.l.b16 %v72
    %v376 = vunpack.c.l.b16 %v73
    %v377 = vunpack.c.l.b16 %v74
    %v378 = vunpack.c.l.b16 %v75
    %v379 = vunpack.c.l.b16 %v76
    %v380 = vunpack.c.l.b16 %v77
    %v381 = vunpack.c.l.b16 %v78
    %v382 = vunpack.c.l.b16 %v79
    %v383 = vunpack.c.l.b16 %v80
    %v384 = vunpack.c.l.b16 %v81
    %v385 = vunpack.c.l.b16 %v82
    %v386 = vunpack.c.l.b16 %v83
    %v387 = vunpack.c.l.b16 %v84
    %v388 = vunpack.c.l.b16 %v85
    %v389 = vunpack.c.l.b16 %v86
    %v390 = vunpack.c.l.b16 %v87
    %v391 = vunpack.c.l.b16 %v88
    %v392 = vunpack.c.l.b16 %v89
    %v393 = vunpack.c.l.b16 %v90
    %v394 = vunpack.c.l.b16 %v91
    %v395 = vunpack.c.l.b16 %v92
    %v396 = vunpack.c.l.b16 %v93
    %v397 = vunpack.c.l.b16 %v94
    %v398 = vunpack.c.l.b16 %v95
    %v399 = vunpack.c.l.b16 %v96
    %v400 = vunpack.c.l.b16 %v97
    %v401 = vunpack.c.l.b16 %v98
    %v402 = vunpack.c.l.b16 %v99
    %v403 = vunpack.c.l.b16 %v100
    %v404 = vunpack.c.l.b16 %v101
    %v405 = vunpack.c.l.b16 %v102
    %v406 = vunpack.c.l.b16 %v103
    %v407 = vunpack.c.l.b16 %v104
    %v408 = vunpack.c.l.b16 %v105
    %v409 = vunpack.c.l.b16 %v106
    %v410 = vunpack.c.l.b16 %v107
    %v411 = vunpack.c.l.b16 %v108
    %v412 = vunpack.c.l.b16 %v109
    %v413 = vunpack.c.l.b16 %v110
    %v414 = vunpack.c.l.b16 %v111
    %v415 = vunpack.c.l.b16 %v112
    %v416 = vunpack.c.l.b16 %v113
    %v417 = vunpack.c.l.b16 %v114
    %v418 = vunpack.c.l.b16 %v115
    %v419 = vunpack.c.l.b16 %v116
    %v420 = vunpack.c.l.b16 %v117
    %v421 = vunpack.c.l.b16 %v118
    %v422 = vunpack.c.l.b16 %v119
    %v423 = vunpack.c.l.b16 %v120
    %v424 = vunpack.c.l.b16 %v121
    %v425 = vunpack.c.l.b16 %v122
    %v426 = vunpack.c.l.b16 %v123
    %v427 = vunpack.c.l.b16 %v124
    %v428 = vunpack.c.l.b16 %v125
    %v429 = vunpack.c.l.b16 %v126
    %v430 = vunpack.c.l.b16 %v127
    %v431 = vunpack.c.l.b16 %v128
    %v432 = vunpack.c.l.b16 %v129
    %v433 = vunpack.c.l.b16 %v130
    %v434 = vunpack.c.l.b16 %v131
    %v435 = vunpack.c.l.b16 %v132
    %v436 = vunpack.c.l.b16 %v133
    %v437 = vunpack.c.l.b16 %v134
    %v438 = vunpack.c.l.b16 %v135
    %v439 = vunpack.c.l.b16 %v136
    %v440 = vunpack.c.l.b16 %v137
    %v441 = vunpack.c.l.b16 %v138
    %v442 = vunpack.c.l.b16 %v139
    %v443 = vunpack.c.l.b16 %v140
    %v444 = vunpack.c.l.b16 %v141
    %v445 = vunpack.c.l.b16 %v142
    %v446 = vunpack.c.l.b16 %v143
    %v447 = vunpack.c.l.b16 %v144
    %v448 = vunpack.c.l.b16 %v145
    %v449 = vunpack.c.l.b16 %v146
    %v450 = vunpack.c.l.b16 %v147
    %v451 = vunpack.c.l.b16 %v148
    %v452 = vunpack.c.l.b16 %v149
    %v453 = vunpack.c.l.b16 %v150
    %v454 = vunpack.c.l.b16 %v151
    %v455 = vunpack.c.l.b16 %v152
    %v456 = vunpack.c.l.b16 %v153
    %v457 = vunpack.c.l.b16 %v154
    %v458 = vunpack.c.l.b16 %v155
    %v459 = vunpack.c.l.b16 %v156
    %v460 = vunpack.c.l.b16 %v157
    %v461 = vunpack.c.l.b16 %v158
    %v462 = vunpack.c.l.b16 %v159
    %v463 = vunpack.c.l.b16 %v160
    %v464 = vunpack.c.l.b16 %v161
    %v465 = vunpack.c.l.b16 %v162
    %v466 = vunpack.c.l.b16 %v163
    %v467 = vunpack.c.l.b16 %v164
    %v468 = vunpack.c.l.b16 %v165
    %v469 = vunpack.c.l.b16 %v166
    %v470 = vunpack.c.l.b16 %v167
    %v471 = vunpack.c.l.b16 %v168
    %v472 = vunpack.c.l.b16 %v169
    %v473 = vunpack.c.l.b16 %v170
    %v474 = vunpack.c.l.b16 %v171
    %v475 = vunpack.c.l.b16 %v172
    %v476 = vunpack.c.l.b16 %v173
    %v477 = vunpack.c.l.b16 %v174
    %v478 = vunpack.c.l.b16 %v175
    %v479 = vunpack.c.l.b16 %v176
    %v480 = vunpack.c.l.b16 %v177
    %v481 = vunpack.c.l.b16 %v178
    %v482 = vunpack.c.l.b16 %v179
    %v483 = vunpack.c.l.b16 %v180
    %v484 = vunpack.c.l.b16 %v181
    %v485 = vunpack.c.l.b16 %v182
    %v486 = vunpack.c.l.b16 %v183
    %v487 = vunpack.c.l.b16 %v184
    %v488 = vunpack.c.l.b16 %v185
    %v489 = vunpack.c.l.b16 %v186
    %v490 = vunpack.c.l.b16 %v187
    %v491 = vunpack.c.l.b16 %v188
    %v492 = vunpack.c.l.b16 %v189
    %v493 = vunpack.c.l.b16 %v190
    %v494 = vunpack.c.l.b16 %v191
    %v495 = vunpack.c.l.b16 %v192
    %v496 = vpack.c.b16 %v369, %v368
    %v497 = vpack.c.b16 %v371, %v370
    %v498 = vpack.c.b16 %v373, %v372
    %v499 = vpack.c.b16 %v375, %v374
    %v500 = vpack.c.b16 %v377, %v376
    %v501 = vpack.c.b16 %v379, %v378
    %v502 = vpack.c.b16 %v381, %v380
    %v503 = vpack.c.b16 %v383, %v382
    %v504 = vpack.c.b16 %v385, %v384
    %v505 = vpack.c.b16 %v387, %v386
    %v506 = vpack.c.b16 %v389, %v388
    %v507 = vpack.c.b16 %v391, %v390
    %v508 = vpack.c.b16 %v393, %v392
    %v509 = vpack.c.b16 %v395, %v394
    %v510 = vpack.c.b16 %v397, %v396
    %v511 = vpack.c.b16 %v399, %v398
    %v512 = vpack.c.b16 %v401, %v400
    %v513 = vpack.c.b16 %v403, %v402
    %v514 = vpack.c.b16 %v405, %v404
    %v515 = vpack.c.b16 %v407, %v406
    %v516 = vpack.c.b16 %v409, %v408
    %v517 = vpack.c.b16 %v411, %v410
    %v518 = vpack.c.b16 %v413, %v412
    %v519 = vpack.c.b16 %v415, %v414
    %v520 = vpack.c.b16 %v417, %v416
    %v521 = vpack.c.b16 %v419, %v418
    %v522 = vpack.c.b16 %v421, %v420
    %v523 = vpack.c.b16 %v423, %v422
    %v524 = vpack.c.b16 %v425, %v424
    %v525 = vpack.c.b16 %v427, %v426
    %v526 = vpack.c.b16 %v429, %v428
    %v527 = vpack.c.b16 %v431, %v430
    %v528 = vpack.c.b16 %v433, %v432
    %v529 = vpack.c.b16 %v435, %v434
    %v530 = vpack.c.b16 %v437, %v436
    %v531 = vpack.c.b16 %v439, %v438
    %v532 = vpack.c.b16 %v441, %v440
    %v533 = vpack.c.b16 %v443, %v442
    %v534 = vpack.c.b16 %v445, %v444
    %v535 = vpack.c.b16 %v447, %v446
    %v536 = vpack.c.b16 %v449, %v448
    %v537 = vpack.c.b16 %v451, %v450
    %v538 = vpack.c.b16 %v453, %v452
    %v539 = vpack.c.b16 %v455, %v454
    %v540 = vpack.c.b16 %v457, %v456
    %v541 = vpack.c.b16 %v459, %v458
    %v542 = vpack.c.b16 %v461, %v460
    %v543 = vpack.c.b16 %v463, %v462
    %v544 = vpack.c.b16 %v465, %v464
    %v545 = vpack.c.b16 %v467, %v466
    %v546 = vpack.c.b16 %v469, %v468
    %v547 = vpack.c.b16 %v471, %v470
    %v548 = vpack.c.b16 %v473, %v472
    %v549 = vpack.c.b16 %v475, %v474
    %v550 = vpack.c.b16 %v477, %v476
    %v551 = vpack.c.b16 %v479, %v478
    %v552 = vpack.c.b16 %v481, %v480
    %v553 = vpack.c.b16 %v483, %v482
    %v554 = vpack.c.b16 %v485, %v484
    %v555 = vpack.c.b16 %v487, %v486
    %v556 = vpack.c.b16 %v489, %v488
    %v557 = vpack.c.b16 %v491, %v490
    %v558 = vpack.c.b16 %v493, %v492
    %v559 = vpack.c.b16 %v495, %v494
    %624 = vmatprep.subr.bf16.mxu0 0
    %625 = vmatpush1.bf16.msra.mxu0 %v496
    %626 = vmatprep.subr.bf16.mxu0 0
    %627 = vmatpush1.bf16.msra.mxu0 %v497
    %628 = vmatprep.subr.bf16.mxu0 0
    %629 = vmatpush1.bf16.msra.mxu0 %v498
    %630 = vmatprep.subr.bf16.mxu0 0
    %631 = vmatpush1.bf16.msra.mxu0 %v499
    %632 = vmatprep.subr.bf16.mxu0 0
    %633 = vmatpush1.bf16.msra.mxu0 %v500
    %634 = vmatprep.subr.bf16.mxu0 0
    %635 = vmatpush1.bf16.msra.mxu0 %v501
    %636 = vmatprep.subr.bf16.mxu0 0
    %637 = vmatpush1.bf16.msra.mxu0 %v502
    %638 = vmatprep.subr.bf16.mxu0 0
    %639 = vmatpush1.bf16.msra.mxu0 %v503
    %640 = vmatprep.subr.bf16.mxu0 0
    %641 = vmatpush1.bf16.msra.mxu0 %v504
    %642 = vmatprep.subr.bf16.mxu0 0
    %643 = vmatpush1.bf16.msra.mxu0 %v505
    %644 = vmatprep.subr.bf16.mxu0 0
    %645 = vmatpush1.bf16.msra.mxu0 %v506
    %646 = vmatprep.subr.bf16.mxu0 0
    %647 = vmatpush1.bf16.msra.mxu0 %v507
    %648 = vmatprep.subr.bf16.mxu0 0
    %649 = vmatpush1.bf16.msra.mxu0 %v508
    %650 = vmatprep.subr.bf16.mxu0 0
    %651 = vmatpush1.bf16.msra.mxu0 %v509
    %652 = vmatprep.subr.bf16.mxu0 0
    %653 = vmatpush1.bf16.msra.mxu0 %v510
    %654 = vmatprep.subr.bf16.mxu0 0
    %655 = vmatpush1.bf16.msra.mxu0 %v511
    %656 = vmatprep.mubr.bf16.mxu0 %v225
    %657 = vmatmul.mubr.bf16.gmra.mrb[0].mxu0 %v224
    %v658 = vpop.f32.mrb[0].mxu0
    %v659 = vadd.f32 %v198, %v658
    %v660 = vpop.f32.mrb[0].mxu0
    %v661 = vpop.f32.mrb[0].mxu0
    %v662 = vadd.f32 %v198, %v661
    %v663 = vpop.f32.mrb[0].mxu0
    %664 = vdwg.mxu0
    %665 = vmatprep.subr.bf16.mxu0 0
    %666 = vmatpush1.bf16.msra.mxu0 %v512
    %667 = vmatprep.subr.bf16.mxu0 0
    %668 = vmatpush1.bf16.msra.mxu0 %v513
    %669 = vmatprep.subr.bf16.mxu0 0
    %670 = vmatpush1.bf16.msra.mxu0 %v514
    %671 = vmatprep.subr.bf16.mxu0 0
    %672 = vmatpush1.bf16.msra.mxu0 %v515
    %673 = vmatprep.subr.bf16.mxu0 0
    %674 = vmatpush1.bf16.msra.mxu0 %v516
    %675 = vmatprep.subr.bf16.mxu0 0
    %676 = vmatpush1.bf16.msra.mxu0 %v517
    %677 = vmatprep.subr.bf16.mxu0 0
    %678 = vmatpush1.bf16.msra.mxu0 %v518
    %679 = vmatprep.subr.bf16.mxu0 0
    %680 = vmatpush1.bf16.msra.mxu0 %v519
    %681 = vmatprep.subr.bf16.mxu0 0
    %682 = vmatpush1.bf16.msra.mxu0 %v520
    %683 = vmatprep.subr.bf16.mxu0 0
    %684 = vmatpush1.bf16.msra.mxu0 %v521
    %685 = vmatprep.subr.bf16.mxu0 0
    %686 = vmatpush1.bf16.msra.mxu0 %v522
    %687 = vmatprep.subr.bf16.mxu0 0
    %688 = vmatpush1.bf16.msra.mxu0 %v523
    %689 = vmatprep.subr.bf16.mxu0 0
    %690 = vmatpush1.bf16.msra.mxu0 %v524
    %691 = vmatprep.subr.bf16.mxu0 0
    %692 = vmatpush1.bf16.msra.mxu0 %v525
    %693 = vmatprep.subr.bf16.mxu0 0
    %694 = vmatpush1.bf16.msra.mxu0 %v526
    %695 = vmatprep.subr.bf16.mxu0 0
    %696 = vmatpush1.bf16.msra.mxu0 %v527
    %697 = vmatprep.mubr.bf16.mxu0 %v227
    %698 = vmatmul.mubr.bf16.gmra.mrb[0].mxu0 %v226
    %v699 = vpop.f32.mrb[0].mxu0
    %v700 = vadd.f32 %v659, %v699
    %v701 = vpop.f32.mrb[0].mxu0
    %v702 = vpop.f32.mrb[0].mxu0
    %v703 = vadd.f32 %v662, %v702
    %v704 = vpop.f32.mrb[0].mxu0
    %705 = vdwg.mxu0
    %706 = vmatprep.subr.bf16.mxu0 0
    %707 = vmatpush1.bf16.msra.mxu0 %v528
    %708 = vmatprep.subr.bf16.mxu0 0
    %709 = vmatpush1.bf16.msra.mxu0 %v529
    %710 = vmatprep.subr.bf16.mxu0 0
    %711 = vmatpush1.bf16.msra.mxu0 %v530
    %712 = vmatprep.subr.bf16.mxu0 0
    %713 = vmatpush1.bf16.msra.mxu0 %v531
    %714 = vmatprep.subr.bf16.mxu0 0
    %715 = vmatpush1.bf16.msra.mxu0 %v532
    %716 = vmatprep.subr.bf16.mxu0 0
    %717 = vmatpush1.bf16.msra.mxu0 %v533
    %718 = vmatprep.subr.bf16.mxu0 0
    %719 = vmatpush1.bf16.msra.mxu0 %v534
    %720 = vmatprep.subr.bf16.mxu0 0
    %721 = vmatpush1.bf16.msra.mxu0 %v535
    %722 = vmatprep.subr.bf16.mxu0 0
    %723 = vmatpush1.bf16.msra.mxu0 %v536
    %724 = vmatprep.subr.bf16.mxu0 0
    %725 = vmatpush1.bf16.msra.mxu0 %v537
    %726 = vmatprep.subr.bf16.mxu0 0
    %727 = vmatpush1.bf16.msra.mxu0 %v538
    %728 = vmatprep.subr.bf16.mxu0 0
    %729 = vmatpush1.bf16.msra.mxu0 %v539
    %730 = vmatprep.subr.bf16.mxu0 0
    %731 = vmatpush1.bf16.msra.mxu0 %v540
    %732 = vmatprep.subr.bf16.mxu0 0
    %733 = vmatpush1.bf16.msra.mxu0 %v541
    %734 = vmatprep.subr.bf16.mxu0 0
    %735 = vmatpush1.bf16.msra.mxu0 %v542
    %736 = vmatprep.subr.bf16.mxu0 0
    %737 = vmatpush1.bf16.msra.mxu0 %v543
    %738 = vmatprep.mubr.bf16.mxu0 %v229
    %739 = vmatmul.mubr.bf16.gmra.mrb[0].mxu0 %v228
    %v740 = vpop.f32.mrb[0].mxu0
    %v741 = vadd.f32 %v700, %v740
    %v742 = vpop.f32.mrb[0].mxu0
    %v743 = vpop.f32.mrb[0].mxu0
    %v744 = vadd.f32 %v703, %v743
    %v745 = vpop.f32.mrb[0].mxu0
    %746 = vdwg.mxu0
    %747 = vmatprep.subr.bf16.mxu0 0
    %748 = vmatpush1.bf16.msra.mxu0 %v544
    %749 = vmatprep.subr.bf16.mxu0 0
    %750 = vmatpush1.bf16.msra.mxu0 %v545
    %751 = vmatprep.subr.bf16.mxu0 0
    %752 = vmatpush1.bf16.msra.mxu0 %v546
    %753 = vmatprep.subr.bf16.mxu0 0
    %754 = vmatpush1.bf16.msra.mxu0 %v547
    %755 = vmatprep.subr.bf16.mxu0 0
    %756 = vmatpush1.bf16.msra.mxu0 %v548
    %757 = vmatprep.subr.bf16.mxu0 0
    %758 = vmatpush1.bf16.msra.mxu0 %v549
    %759 = vmatprep.subr.bf16.mxu0 0
    %760 = vmatpush1.bf16.msra.mxu0 %v550
    %761 = vmatprep.subr.bf16.mxu0 0
    %762 = vmatpush1.bf16.msra.mxu0 %v551
    %763 = vmatprep.subr.bf16.mxu0 0
    %764 = vmatpush1.bf16.msra.mxu0 %v552
    %765 = vmatprep.subr.bf16.mxu0 0
    %766 = vmatpush1.bf16.msra.mxu0 %v553
    %767 = vmatprep.subr.bf16.mxu0 0
    %768 = vmatpush1.bf16.msra.mxu0 %v554
    %769 = vmatprep.subr.bf16.mxu0 0
    %770 = vmatpush1.bf16.msra.mxu0 %v555
    %771 = vmatprep.subr.bf16.mxu0 0
    %772 = vmatpush1.bf16.msra.mxu0 %v556
    %773 = vmatprep.subr.bf16.mxu0 0
    %774 = vmatpush1.bf16.msra.mxu0 %v557
    %775 = vmatprep.subr.bf16.mxu0 0
    %776 = vmatpush1.bf16.msra.mxu0 %v558
    %777 = vmatprep.subr.bf16.mxu0 0
    %778 = vmatpush1.bf16.msra.mxu0 %v559
    %779 = vmatprep.mubr.bf16.mxu0 %v231
    %780 = vmatmul.mubr.bf16.gmra.mrb[0].mxu0 %v230
    %v781 = vpop.f32.mrb[0].mxu0
    %v782 = vadd.f32 %v741, %v781
    %v783 = vpop.f32.mrb[0].mxu0
    %v784 = vpop.f32.mrb[0].mxu0
    %v785 = vadd.f32 %v744, %v784
    %v786 = vpop.f32.mrb[0].mxu0
    %787 = vdwg.mxu0
    %v788 = vmax.f32 %v782, 0.0
    %v789 = vmax.f32 %v785, 0.0
    %v790 = vpack.c.bf16 %v789, %v788
    %v791 = vld [vmem:[%s3] sm:$0xf]
    %v792 = vld [vmem:[%s3 + $0x4] sm:$0xf]
    %v793 = vld [vmem:[%s3 + $0x8] sm:$0xf]
    %v794 = vld [vmem:[%s3 + $0xc] sm:$0xf]
    %v795 = vld [vmem:[%s3 + $0x10] sm:$0xf]
    %v796 = vld [vmem:[%s3 + $0x14] sm:$0xf]
    %v797 = vld [vmem:[%s3 + $0x18] sm:$0xf]
    %v798 = vld [vmem:[%s3 + $0x1c] sm:$0xf]
    %v799 = vld [vmem:[%s3 + $0x20] sm:$0xf]
    %v800 = vld [vmem:[%s3 + $0x24] sm:$0xf]
    %v801 = vld [vmem:[%s3 + $0x28] sm:$0xf]
    %v802 = vld [vmem:[%s3 + $0x2c] sm:$0xf]
    %v803 = vld [vmem:[%s3 + $0x30] sm:$0xf]
    %v804 = vld [vmem:[%s3 + $0x34] sm:$0xf]
    %v805 = vld [vmem:[%s3 + $0x38] sm:$0xf]
    %v806 = vld [vmem:[%s3 + $0x3c] sm:$0xf]
    %v807 = vld [vmem:[%s4] sm:$0x1]
    %v809 = vlaneseq
    %v810 = vshrl.u32 %v809, 7
    %v811 = vsub.s32 0, %v810
    %v812 = vrot.slane %v807, %v811
    %v830 = vunpack.c.l.b16 %v791
    %v831 = vunpack.c.l.b16 %v792
    %v832 = vunpack.c.l.b16 %v793
    %v833 = vunpack.c.l.b16 %v794
    %v834 = vunpack.c.l.b16 %v795
    %v835 = vunpack.c.l.b16 %v796
    %v836 = vunpack.c.l.b16 %v797
    %v837 = vunpack.c.l.b16 %v798
    %v838 = vunpack.c.l.b16 %v799
    %v839 = vunpack.c.l.b16 %v800
    %v840 = vunpack.c.l.b16 %v801
    %v841 = vunpack.c.l.b16 %v802
    %v842 = vunpack.c.l.b16 %v803
    %v843 = vunpack.c.l.b16 %v804
    %v844 = vunpack.c.l.b16 %v805
    %v845 = vunpack.c.l.b16 %v806
    %v846 = vpack.c.b16 %v831, %v830
    %v847 = vpack.c.b16 %v833, %v832
    %v848 = vpack.c.b16 %v835, %v834
    %v849 = vpack.c.b16 %v837, %v836
    %v850 = vpack.c.b16 %v839, %v838
    %v851 = vpack.c.b16 %v841, %v840
    %v852 = vpack.c.b16 %v843, %v842
    %v853 = vpack.c.b16 %v845, %v844
    %862 = vmatprep.subr.bf16.mxu0 0
    %863 = vmatpush1.bf16.msra.mxu0 %v846
    %864 = vmatprep.subr.bf16.mxu0 0
    %865 = vmatpush1.bf16.msra.mxu0 %v847
    %866 = vmatprep.subr.bf16.mxu0 0
    %867 = vmatpush1.bf16.msra.mxu0 %v848
    %868 = vmatprep.subr.bf16.mxu0 0
    %869 = vmatpush1.bf16.msra.mxu0 %v849
    %870 = vmatprep.subr.bf16.mxu0 0
    %871 = vmatpush1.bf16.msra.mxu0 %v850
    %872 = vmatprep.subr.bf16.mxu0 0
    %873 = vmatpush1.bf16.msra.mxu0 %v851
    %874 = vmatprep.subr.bf16.mxu0 0
    %875 = vmatpush1.bf16.msra.mxu0 %v852
    %876 = vmatprep.subr.bf16.mxu0 0
    %877 = vmatpush1.bf16.msra.mxu0 %v853
    %878 = vmatprep.subr.bf16.mxu0 0
    %879 = vmatpush1.bf16.msra.mxu0 0
    %880 = vmatprep.subr.bf16.mxu0 0
    %881 = vmatpush1.bf16.msra.mxu0 0
    %882 = vmatprep.subr.bf16.mxu0 0
    %883 = vmatpush1.bf16.msra.mxu0 0
    %884 = vmatprep.subr.bf16.mxu0 0
    %885 = vmatpush1.bf16.msra.mxu0 0
    %886 = vmatprep.subr.bf16.mxu0 0
    %887 = vmatpush1.bf16.msra.mxu0 0
    %888 = vmatprep.subr.bf16.mxu0 0
    %889 = vmatpush1.bf16.msra.mxu0 0
    %890 = vmatprep.subr.bf16.mxu0 0
    %891 = vmatpush1.bf16.msra.mxu0 0
    %892 = vmatprep.subr.bf16.mxu0 0
    %893 = vmatpush1.bf16.msra.mxu0 0
    %894 = vmatprep.mubr.bf16.mxu0 0
    %895 = vmatmul.mubr.bf16.gmra.mrb[0].mxu0 %v790
    %v896 = vpop.f32.mrb[0].mxu0
    %v897 = vadd.f32 %v812, %v896
    %v898 = vpop.f32.mrb[0].mxu0
    %v899 = vpop.f32.mrb[0].mxu0
    %v900 = vadd.f32 %v812, %v899
    %v901 = vpop.f32.mrb[0].mxu0
    %902 = vdwg.mxu0
    %v903 = vmax.f32 %v897, 0.0
    %v904 = vmax.f32 %v900, 0.0
    %v905 = vlaneseq
    %v906 = vand.u32 %v905, 127
    %vm907 = vcmp.eq.s32.totalorder %v906, 0
    %908 = vrot.lane.b32.xlu0 %v903, 1
    %v909 = vpop.permute.xlu0 %908
    %910 = vrot.lane.b32.xlu0 %v904, 1
    %v911 = vpop.permute.xlu0 %910
    %v912 = vsel %vm907, 0.0, %v909
    %v913 = vsel %vm907, 0.0, %v911
    %vm914 = vcmp.eq.s32.totalorder %v906, 127
    %915 = vrot.lane.b32.xlu0 %v903, 127
    %v916 = vpop.permute.xlu0 %915
    %917 = vrot.lane.b32.xlu0 %v904, 127
    %v918 = vpop.permute.xlu0 %917
    %v919 = vsel %vm914, 0.0, %v916
    %v920 = vsel %vm914, 0.0, %v918
    %s921 = sld [smem:[#allocation5]]
    %v922 = vstv %s921
    %v923 = vmul.f32 %v912, %v922
    %v924 = vmul.f32 %v913, %v922
    %s925 = sld [smem:[#allocation5 + $0x1]]
    %v926 = vstv %s925
    %v927 = vmul.f32 %v903, %v926
    %v928 = vmul.f32 %v904, %v926
    %v929 = vadd.f32 %v923, %v927
    %v930 = vadd.f32 %v924, %v928
    %s931 = sld [smem:[#allocation5 + $0x2]]
    %v932 = vstv %s931
    %v933 = vmul.f32 %v919, %v932
    %v934 = vmul.f32 %v920, %v932
    %v935 = vadd.f32 %v929, %v933
    %v936 = vadd.f32 %v930, %v934
    %s937 = sld [smem:[#allocation5 + $0x3]]
    %v938 = vstv %s937
    %v939 = vadd.f32 %v935, %v938
    %v940 = vadd.f32 %v936, %v938
    %v941 = vmax.f32 %v939, 0.0
    %v942 = vmax.f32 %v940, 0.0
    %v943 = vpack.c.bf16 %v942, %v941
    %s944 = sld [smem:[#allocation5 + $0x80]]
    %v945 = vstv %s944
    %v946 = vmul.f32 %v912, %v945
    %v947 = vmul.f32 %v913, %v945
    %s948 = sld [smem:[#allocation5 + $0x81]]
    %v949 = vstv %s948
    %v950 = vmul.f32 %v903, %v949
    %v951 = vmul.f32 %v904, %v949
    %v952 = vadd.f32 %v946, %v950
    %v953 = vadd.f32 %v947, %v951
    %s954 = sld [smem:[#allocation5 + $0x82]]
    %v955 = vstv %s954
    %v956 = vmul.f32 %v919, %v955
    %v957 = vmul.f32 %v920, %v955
    %v958 = vadd.f32 %v952, %v956
    %v959 = vadd.f32 %v953, %v957
    %s960 = sld [smem:[#allocation5 + $0x83]]
    %v961 = vstv %s960
    %v962 = vadd.f32 %v958, %v961
    %v963 = vadd.f32 %v959, %v961
    %v964 = vmax.f32 %v962, 0.0
    %v965 = vmax.f32 %v963, 0.0
    %v966 = vpack.c.bf16 %v965, %v964
    %s967 = sld [smem:[#allocation5 + $0x100]]
    %v968 = vstv %s967
    %v969 = vmul.f32 %v912, %v968
    %v970 = vmul.f32 %v913, %v968
    %s971 = sld [smem:[#allocation5 + $0x101]]
    %v972 = vstv %s971
    %v973 = vmul.f32 %v903, %v972
    %v974 = vmul.f32 %v904, %v972
    %v975 = vadd.f32 %v969, %v973
    %v976 = vadd.f32 %v970, %v974
    %s977 = sld [smem:[#allocation5 + $0x102]]
    %v978 = vstv %s977
    %v979 = vmul.f32 %v919, %v978
    %v980 = vmul.f32 %v920, %v978
    %v981 = vadd.f32 %v975, %v979
    %v982 = vadd.f32 %v976, %v980
    %s983 = sld [smem:[#allocation5 + $0x103]]
    %v984 = vstv %s983
    %v985 = vadd.f32 %v981, %v984
    %v986 = vadd.f32 %v982, %v984
    %v987 = vmax.f32 %v985, 0.0
    %v988 = vmax.f32 %v986, 0.0
    %v989 = vpack.c.bf16 %v988, %v987
    %s990 = sld [smem:[#allocation5 + $0x180]]
    %v991 = vstv %s990
    %v992 = vmul.f32 %v912, %v991
    %v993 = vmul.f32 %v913, %v991
    %s994 = sld [smem:[#allocation5 + $0x181]]
    %v995 = vstv %s994
    %v996 = vmul.f32 %v903, %v995
    %v997 = vmul.f32 %v904, %v995
    %v998 = vadd.f32 %v992, %v996
    %v999 = vadd.f32 %v993, %v997
    %s1000 = sld [smem:[#allocation5 + $0x182]]
    %v1001 = vstv %s1000
    %v1002 = vmul.f32 %v919, %v1001
    %v1003 = vmul.f32 %v920, %v1001
    %v1004 = vadd.f32 %v998, %v1002
    %v1005 = vadd.f32 %v999, %v1003
    %s1006 = sld [smem:[#allocation5 + $0x183]]
    %v1007 = vstv %s1006
    %v1008 = vadd.f32 %v1004, %v1007
    %v1009 = vadd.f32 %v1005, %v1007
    %v1010 = vmax.f32 %v1008, 0.0
    %v1011 = vmax.f32 %v1009, 0.0
    %v1012 = vpack.c.bf16 %v1011, %v1010
    %v1013 = vld [vmem:[%s6] sm:$0xf]
    %v1014 = vld [vmem:[%s6 + $0x4] sm:$0xf]
    %v1015 = vld [vmem:[%s6 + $0x8] sm:$0xf]
    %v1016 = vld [vmem:[%s6 + $0xc] sm:$0xf]
    %v1017 = vld [vmem:[%s6 + $0x10] sm:$0xf]
    %v1018 = vld [vmem:[%s6 + $0x14] sm:$0xf]
    %v1019 = vld [vmem:[%s6 + $0x18] sm:$0xf]
    %v1020 = vld [vmem:[%s6 + $0x1c] sm:$0xf]
    %v1021 = vld [vmem:[%s6 + $0x20] sm:$0xf]
    %v1022 = vld [vmem:[%s6 + $0x24] sm:$0xf]
    %v1023 = vld [vmem:[%s6 + $0x28] sm:$0xf]
    %v1024 = vld [vmem:[%s6 + $0x2c] sm:$0xf]
    %v1025 = vld [vmem:[%s6 + $0x30] sm:$0xf]
    %v1026 = vld [vmem:[%s6 + $0x34] sm:$0xf]
    %v1027 = vld [vmem:[%s6 + $0x38] sm:$0xf]
    %v1028 = vld [vmem:[%s6 + $0x3c] sm:$0xf]
    %v1029 = vld [vmem:[%s6 + $0x40] sm:$0xf]
    %v1030 = vld [vmem:[%s6 + $0x44] sm:$0xf]
    %v1031 = vld [vmem:[%s6 + $0x48] sm:$0xf]
    %v1032 = vld [vmem:[%s6 + $0x4c] sm:$0xf]
    %v1033 = vld [vmem:[%s6 + $0x50] sm:$0xf]
    %v1034 = vld [vmem:[%s6 + $0x54] sm:$0xf]
    %v1035 = vld [vmem:[%s6 + $0x58] sm:$0xf]
    %v1036 = vld [vmem:[%s6 + $0x5c] sm:$0xf]
    %v1037 = vld [vmem:[%s6 + $0x60] sm:$0xf]
    %v1038 = vld [vmem:[%s6 + $0x64] sm:$0xf]
    %v1039 = vld [vmem:[%s6 + $0x68] sm:$0xf]
    %v1040 = vld [vmem:[%s6 + $0x6c] sm:$0xf]
    %v1041 = vld [vmem:[%s6 + $0x70] sm:$0xf]
    %v1042 = vld [vmem:[%s6 + $0x74] sm:$0xf]
    %v1043 = vld [vmem:[%s6 + $0x78] sm:$0xf]
    %v1044 = vld [vmem:[%s6 + $0x7c] sm:$0xf]
    %v1045 = vld [vmem:[%s6 + $0x80] sm:$0xf]
    %v1046 = vld [vmem:[%s6 + $0x84] sm:$0xf]
    %v1047 = vld [vmem:[%s6 + $0x88] sm:$0xf]
    %v1048 = vld [vmem:[%s6 + $0x8c] sm:$0xf]
    %v1049 = vld [vmem:[%s6 + $0x90] sm:$0xf]
    %v1050 = vld [vmem:[%s6 + $0x94] sm:$0xf]
    %v1051 = vld [vmem:[%s6 + $0x98] sm:$0xf]
    %v1052 = vld [vmem:[%s6 + $0x9c] sm:$0xf]
    %v1053 = vld [vmem:[%s6 + $0xa0] sm:$0xf]
    %v1054 = vld [vmem:[%s6 + $0xa4] sm:$0xf]
    %v1055 = vld [vmem:[%s6 + $0xa8] sm:$0xf]
    %v1056 = vld [vmem:[%s6 + $0xac] sm:$0xf]
    %v1057 = vld [vmem:[%s6 + $0xb0] sm:$0xf]
    %v1058 = vld [vmem:[%s6 + $0xb4] sm:$0xf]
    %v1059 = vld [vmem:[%s6 + $0xb8] sm:$0xf]
    %v1060 = vld [vmem:[%s6 + $0xbc] sm:$0xf]
    %v1061 = vld [vmem:[%s6 + $0xc0] sm:$0xf]
    %v1062 = vld [vmem:[%s6 + $0xc4] sm:$0xf]
    %v1063 = vld [vmem:[%s6 + $0xc8] sm:$0xf]
    %v1064 = vld [vmem:[%s6 + $0xcc] sm:$0xf]
    %v1065 = vld [vmem:[%s6 + $0xd0] sm:$0xf]
    %v1066 = vld [vmem:[%s6 + $0xd4] sm:$0xf]
    %v1067 = vld [vmem:[%s6 + $0xd8] sm:$0xf]
    %v1068 = vld [vmem:[%s6 + $0xdc] sm:$0xf]
    %v1069 = vld [vmem:[%s6 + $0xe0] sm:$0xf]
    %v1070 = vld [vmem:[%s6 + $0xe4] sm:$0xf]
    %v1071 = vld [vmem:[%s6 + $0xe8] sm:$0xf]
    %v1072 = vld [vmem:[%s6 + $0xec] sm:$0xf]
    %v1073 = vld [vmem:[%s6 + $0xf0] sm:$0xf]
    %v1074 = vld [vmem:[%s6 + $0xf4] sm:$0xf]
    %v1075 = vld [vmem:[%s6 + $0xf8] sm:$0xf]
    %v1076 = vld [vmem:[%s6 + $0xfc] sm:$0xf]
    %v1077 = vld [vmem:[%s7] sm:$0x1]
    %v1079 = vlaneseq
    %v1080 = vshrl.u32 %v1079, 7
    %v1081 = vsub.s32 0, %v1080
    %v1082 = vrot.slane %v1077, %v1081
    %v1148 = vunpack.c.l.b16 %v1013
    %v1149 = vunpack.c.l.b16 %v1014
    %v1150 = vunpack.c.l.b16 %v1015
    %v1151 = vunpack.c.l.b16 %v1016
    %v1152 = vunpack.c.l.b16 %v1017
    %v1153 = vunpack.c.l.b16 %v1018
    %v1154 = vunpack.c.l.b16 %v1019
    %v1155 = vunpack.c.l.b16 %v1020
    %v1156 = vunpack.c.l.b16 %v1021
    %v1157 = vunpack.c.l.b16 %v1022
    %v1158 = vunpack.c.l.b16 %v1023
    %v1159 = vunpack.c.l.b16 %v1024
    %v1160 = vunpack.c.l.b16 %v1025
    %v1161 = vunpack.c.l.b16 %v1026
    %v1162 = vunpack.c.l.b16 %v1027
    %v1163 = vunpack.c.l.b16 %v1028
    %v1164 = vunpack.c.l.b16 %v1029
    %v1165 = vunpack.c.l.b16 %v1030
    %v1166 = vunpack.c.l.b16 %v1031
    %v1167 = vunpack.c.l.b16 %v1032
    %v1168 = vunpack.c.l.b16 %v1033
    %v1169 = vunpack.c.l.b16 %v1034
    %v1170 = vunpack.c.l.b16 %v1035
    %v1171 = vunpack.c.l.b16 %v1036
    %v1172 = vunpack.c.l.b16 %v1037
    %v1173 = vunpack.c.l.b16 %v1038
    %v1174 = vunpack.c.l.b16 %v1039
    %v1175 = vunpack.c.l.b16 %v1040
    %v1176 = vunpack.c.l.b16 %v1041
    %v1177 = vunpack.c.l.b16 %v1042
    %v1178 = vunpack.c.l.b16 %v1043
    %v1179 = vunpack.c.l.b16 %v1044
    %v1180 = vunpack.c.l.b16 %v1045
    %v1181 = vunpack.c.l.b16 %v1046
    %v1182 = vunpack.c.l.b16 %v1047
    %v1183 = vunpack.c.l.b16 %v1048
    %v1184 = vunpack.c.l.b16 %v1049
    %v1185 = vunpack.c.l.b16 %v1050
    %v1186 = vunpack.c.l.b16 %v1051
    %v1187 = vunpack.c.l.b16 %v1052
    %v1188 = vunpack.c.l.b16 %v1053
    %v1189 = vunpack.c.l.b16 %v1054
    %v1190 = vunpack.c.l.b16 %v1055
    %v1191 = vunpack.c.l.b16 %v1056
    %v1192 = vunpack.c.l.b16 %v1057
    %v1193 = vunpack.c.l.b16 %v1058
    %v1194 = vunpack.c.l.b16 %v1059
    %v1195 = vunpack.c.l.b16 %v1060
    %v1196 = vunpack.c.l.b16 %v1061
    %v1197 = vunpack.c.l.b16 %v1062
    %v1198 = vunpack.c.l.b16 %v1063
    %v1199 = vunpack.c.l.b16 %v1064
    %v1200 = vunpack.c.l.b16 %v1065
    %v1201 = vunpack.c.l.b16 %v1066
    %v1202 = vunpack.c.l.b16 %v1067
    %v1203 = vunpack.c.l.b16 %v1068
    %v1204 = vunpack.c.l.b16 %v1069
    %v1205 = vunpack.c.l.b16 %v1070
    %v1206 = vunpack.c.l.b16 %v1071
    %v1207 = vunpack.c.l.b16 %v1072
    %v1208 = vunpack.c.l.b16 %v1073
    %v1209 = vunpack.c.l.b16 %v1074
    %v1210 = vunpack.c.l.b16 %v1075
    %v1211 = vunpack.c.l.b16 %v1076
    %v1212 = vpack.c.b16 %v1149, %v1148
    %v1213 = vpack.c.b16 %v1151, %v1150
    %v1214 = vpack.c.b16 %v1153, %v1152
    %v1215 = vpack.c.b16 %v1155, %v1154
    %v1216 = vpack.c.b16 %v1157, %v1156
    %v1217 = vpack.c.b16 %v1159, %v1158
    %v1218 = vpack.c.b16 %v1161, %v1160
    %v1219 = vpack.c.b16 %v1163, %v1162
    %v1220 = vpack.c.b16 %v1165, %v1164
    %v1221 = vpack.c.b16 %v1167, %v1166
    %v1222 = vpack.c.b16 %v1169, %v1168
    %v1223 = vpack.c.b16 %v1171, %v1170
    %v1224 = vpack.c.b16 %v1173, %v1172
    %v1225 = vpack.c.b16 %v1175, %v1174
    %v1226 = vpack.c.b16 %v1177, %v1176
    %v1227 = vpack.c.b16 %v1179, %v1178
    %v1228 = vpack.c.b16 %v1181, %v1180
    %v1229 = vpack.c.b16 %v1183, %v1182
    %v1230 = vpack.c.b16 %v1185, %v1184
    %v1231 = vpack.c.b16 %v1187, %v1186
    %v1232 = vpack.c.b16 %v1189, %v1188
    %v1233 = vpack.c.b16 %v1191, %v1190
    %v1234 = vpack.c.b16 %v1193, %v1192
    %v1235 = vpack.c.b16 %v1195, %v1194
    %v1236 = vpack.c.b16 %v1197, %v1196
    %v1237 = vpack.c.b16 %v1199, %v1198
    %v1238 = vpack.c.b16 %v1201, %v1200
    %v1239 = vpack.c.b16 %v1203, %v1202
    %v1240 = vpack.c.b16 %v1205, %v1204
    %v1241 = vpack.c.b16 %v1207, %v1206
    %v1242 = vpack.c.b16 %v1209, %v1208
    %v1243 = vpack.c.b16 %v1211, %v1210
    %1276 = vmatprep.subr.bf16.mxu0 0
    %1277 = vmatpush1.bf16.msra.mxu0 %v1212
    %1278 = vmatprep.subr.bf16.mxu0 0
    %1279 = vmatpush1.bf16.msra.mxu0 %v1213
    %1280 = vmatprep.subr.bf16.mxu0 0
    %1281 = vmatpush1.bf16.msra.mxu0 %v1214
    %1282 = vmatprep.subr.bf16.mxu0 0
    %1283 = vmatpush1.bf16.msra.mxu0 %v1215
    %1284 = vmatprep.subr.bf16.mxu0 0
    %1285 = vmatpush1.bf16.msra.mxu0 %v1216
    %1286 = vmatprep.subr.bf16.mxu0 0
    %1287 = vmatpush1.bf16.msra.mxu0 %v1217
    %1288 = vmatprep.subr.bf16.mxu0 0
    %1289 = vmatpush1.bf16.msra.mxu0 %v1218
    %1290 = vmatprep.subr.bf16.mxu0 0
    %1291 = vmatpush1.bf16.msra.mxu0 %v1219
    %1292 = vmatprep.subr.bf16.mxu0 0
    %1293 = vmatpush1.bf16.msra.mxu0 %v1220
    %1294 = vmatprep.subr.bf16.mxu0 0
    %1295 = vmatpush1.bf16.msra.mxu0 %v1221
    %1296 = vmatprep.subr.bf16.mxu0 0
    %1297 = vmatpush1.bf16.msra.mxu0 %v1222
    %1298 = vmatprep.subr.bf16.mxu0 0
    %1299 = vmatpush1.bf16.msra.mxu0 %v1223
    %1300 = vmatprep.subr.bf16.mxu0 0
    %1301 = vmatpush1.bf16.msra.mxu0 %v1224
    %1302 = vmatprep.subr.bf16.mxu0 0
    %1303 = vmatpush1.bf16.msra.mxu0 %v1225
    %1304 = vmatprep.subr.bf16.mxu0 0
    %1305 = vmatpush1.bf16.msra.mxu0 %v1226
    %1306 = vmatprep.subr.bf16.mxu0 0
    %1307 = vmatpush1.bf16.msra.mxu0 %v1227
    %1308 = vmatprep.mubr.bf16.mxu0 %v966
    %1309 = vmatmul.mubr.bf16.gmra.mrb[0].mxu0 %v943
    %v1310 = vpop.f32.mrb[0].mxu0
    %v1311 = vadd.f32 %v1082, %v1310
    %v1312 = vpop.f32.mrb[0].mxu0
    %v1313 = vpop.f32.mrb[0].mxu0
    %v1314 = vadd.f32 %v1082, %v1313
    %v1315 = vpop.f32.mrb[0].mxu0
    %1316 = vdwg.mxu0
    %1317 = vmatprep.subr.bf16.mxu0 0
    %1318 = vmatpush1.bf16.msra.mxu0 %v1228
    %1319 = vmatprep.subr.bf16.mxu0 0
    %1320 = vmatpush1.bf16.msra.mxu0 %v1229
    %1321 = vmatprep.subr.bf16.mxu0 0
    %1322 = vmatpush1.bf16.msra.mxu0 %v1230
    %1323 = vmatprep.subr.bf16.mxu0 0
    %1324 = vmatpush1.bf16.msra.mxu0 %v1231
    %1325 = vmatprep.subr.bf16.mxu0 0
    %1326 = vmatpush1.bf16.msra.mxu0 %v1232
    %1327 = vmatprep.subr.bf16.mxu0 0
    %1328 = vmatpush1.bf16.msra.mxu0 %v1233
    %1329 = vmatprep.subr.bf16.mxu0 0
    %1330 = vmatpush1.bf16.msra.mxu0 %v1234
    %1331 = vmatprep.subr.bf16.mxu0 0
    %1332 = vmatpush1.bf16.msra.mxu0 %v1235
    %1333 = vmatprep.subr.bf16.mxu0 0
    %1334 = vmatpush1.bf16.msra.mxu0 %v1236
    %1335 = vmatprep.subr.bf16.mxu0 0
    %1336 = vmatpush1.bf16.msra.mxu0 %v1237
    %1337 = vmatprep.subr.bf16.mxu0 0
    %1338 = vmatpush1.bf16.msra.mxu0 %v1238
    %1339 = vmatprep.subr.bf16.mxu0 0
    %1340 = vmatpush1.bf16.msra.mxu0 %v1239
    %1341 = vmatprep.subr.bf16.mxu0 0
    %1342 = vmatpush1.bf16.msra.mxu0 %v1240
    %1343 = vmatprep.subr.bf16.mxu0 0
    %1344 = vmatpush1.bf16.msra.mxu0 %v1241
    %1345 = vmatprep.subr.bf16.mxu0 0
    %1346 = vmatpush1.bf16.msra.mxu0 %v1242
    %1347 = vmatprep.subr.bf16.mxu0 0
    %1348 = vmatpush1.bf16.msra.mxu0 %v1243
    %1349 = vmatprep.mubr.bf16.mxu0 %v1012
    %1350 = vmatmul.mubr.bf16.gmra.mrb[0].mxu0 %v989
    %v1351 = vpop.f32.mrb[0].mxu0
    %v1352 = vadd.f32 %v1311, %v1351
    %v1353 = vpop.f32.mrb[0].mxu0
    %v1354 = vpop.f32.mrb[0].mxu0
    %v1355 = vadd.f32 %v1314, %v1354
    %v1356 = vpop.f32.mrb[0].mxu0
    %1357 = vdwg.mxu0
    %1358 = vst [vmem:[%s8] sm:$0xff] %v1352
    %1359 = vst [vmem:[%s8 + $0x8] sm:$0xff] %v1355
    // Predicated region
    $region42: #{combined_forward.1} parent=1 // pred_check
      _
    $region43: #{combined_forward.1} parent=1 // pred_check_branch
      %1361 = sbr.rel (0) target = $region45
    $region44: #{combined_forward.1} parent=1 // pred_region
      _
    $region45: #{combined_forward.1} parent=1 // pred_fallthru
      _
    // Predicated region
    $region46: #{combined_forward.1} parent=1 // pred_check
      _
    $region47: #{combined_forward.1} parent=1 // pred_check_branch
      %1363 = sbr.rel (0) target = $region49
    $region48: #{combined_forward.1} parent=1 // pred_region
      _
    $region49: #{combined_forward.1} parent=1 // pred_fallthru
      _
    %1364 = vsyncpa [#allocation3], 1
    %1365 = vsyncpa [#allocation4], 1

</llo_original>
